<compile_context>
chip_gen: v7x
topology: tpu7x:2x2x1
jax: 0.10.0
libtpu: 0.0.40
codegen_flags: <defaults>
</compile_context>

<pallas_src>
import jax
import jax.numpy as jnp
import numpy as np
from jax import lax
from jax.experimental import pallas as pl
from jax.experimental.pallas import tpu as pltpu


def casrel_kernel(enc_ref, maps_ref, w_all_ref, b_all_ref, out_ref):
    """One grid step == block_b batch elements.

    enc_ref   : (Bt, L, D)      encoded_text tile, bf16
    maps_ref  : (Bt, L, 1)      0.5 * (sub_head_mapping + sub_tail_mapping), f32
    w_all_ref : (D, N_pad)      [w_sh | w_st | w_oh | w_ot | 0-pad], bf16 (resident)
    b_all_ref : (1, N_pad)      packed biases, f32 (resident)
    out_ref   : (Bt, L, N_pad)  sigmoid logits, bf16 (lane-dense slab)
    """
    Bt, L, D = enc_ref.shape
    N = w_all_ref.shape[1]

    enc = enc_ref[...]                                        # (Bt, L, D) bf16

    # ---- fused heads: one wide MXU matmul, f32 accumulation ----
    fused = jnp.dot(enc.reshape(Bt * L, D), w_all_ref[...],
                    preferred_element_type=jnp.float32)        # (Bt*L, N)
    fused = fused.reshape(Bt, L, N)

    # ---- subject-conditioned correction, derived from the fused slab ----
    # corr = (0.5*(sh+st)) @ enc @ W_all == sub @ W_all, computed as a VPU
    # multiply + reduce over L on data already sitting in vregs (no second
    # skinny MXU matmul, no w_obj operand).
    corr = jnp.sum(maps_ref[...] * fused, axis=1, keepdims=True)   # (Bt, 1, N)
    # Only the object columns take the rank-1 correction: zero the two
    # subject columns (padding columns of `fused` are already exactly zero).
    col = lax.broadcasted_iota(jnp.int32, corr.shape, 2)
    corr = jnp.where(col >= 2, corr, 0.0)

    # f32 add + sigmoid (v5e VPU/EUP have no bf16), bf16 store.
    out_ref[...] = jax.nn.sigmoid(fused + corr + b_all_ref[...]).astype(out_ref.dtype)


def pack_casrel_params(params):
    """Pack the four linear heads once (hoisted out of the per-call path)."""
    D = params["w_sh"].shape[0]
    R = params["w_oh"].shape[1]
    n_out = 2 + 2 * R
    n_pad = ((n_out + 127) // 128) * 128                 # lane-dense columns
    f32 = jnp.float32

    w_all = jnp.zeros((D, n_pad), f32)
    w_all = w_all.at[:, 0:1].set(params["w_sh"].astype(f32))
    w_all = w_all.at[:, 1:2].set(params["w_st"].astype(f32))
    w_all = w_all.at[:, 2:2 + R].set(params["w_oh"].astype(f32))
    w_all = w_all.at[:, 2 + R:2 + 2 * R].set(params["w_ot"].astype(f32))

    b_all = jnp.zeros((1, n_pad), f32)
    b_all = b_all.at[:, 0:1].set(params["b_sh"].reshape(1, 1).astype(f32))
    b_all = b_all.at[:, 1:2].set(params["b_st"].reshape(1, 1).astype(f32))
    b_all = b_all.at[:, 2:2 + R].set(params["b_oh"].reshape(1, R).astype(f32))
    b_all = b_all.at[:, 2 + R:2 + 2 * R].set(params["b_ot"].reshape(1, R).astype(f32))

    return {
        "w_all": w_all.astype(jnp.bfloat16),   # bf16 MXU operand
        "b_all": b_all,                        # f32 bias row
        "R": R,
        "n_out": n_out,
        "n_pad": n_pad,
        "D": D,
    }


def _vmem_capacity_bytes():
    try:
        info = pltpu.get_tpu_info()
        cap = getattr(info, "vmem_capacity_bytes", None)
        if cap:
            return int(cap)
    except Exception:
        pass
    return 64 * 1024 * 1024          # conservative fallback (v7x per-TC size)


def casrel_forward(encoded_text, sub_head, sub_tail, packed, block_b=None):
    """encoded_text: (B, L, D); sub_head/sub_tail: (B, L) float masks."""
    B, L, D = encoded_text.shape
    assert D == packed["D"]
    R, n_out, n_pad = packed["R"], packed["n_out"], packed["n_pad"]

    # bf16 matmul operands (half the HBM traffic, native MXU rate); all
    # accumulation stays f32 via preferred_element_type inside the kernel.
    enc_bf16 = encoded_text.astype(jnp.bfloat16)
    # Pre-summed subject maps: (B, L, 1) f32 -> single tiny operand.
    maps = (0.5 * (sub_head + sub_tail))[:, :, None].astype(jnp.float32)

    # ---- VMEM budget & tile selection -------------------------------------
    vmem_cap = _vmem_capacity_bytes()
    vmem_budget = min(int(0.70 * vmem_cap), 100 * 1024 * 1024)
    headroom = 4 * 1024 * 1024       # Mosaic internal scratch etc.
    # Constant-index operands are double-buffered by the pipeline too.
    resident = 2 * (D * n_pad * 2 + 8 * n_pad * 4)

    def tile_bytes(bt):
        enc_t = bt * L * D * 2                                   # bf16
        maps_t = bt * ((L + 7) // 8 * 8) * 128 * 4               # (bt,L,1) f32, lane-padded
        out_t = bt * L * n_pad * 2                               # bf16
        return enc_t + maps_t + out_t

    if block_b is None:
        fit = 1
        for cand in range(1, B + 1):
            if resident + 2 * tile_bytes(cand) + headroom <= vmem_budget:
                fit = cand
        # keep >= 2 grid steps so both v7x TensorCores get work
        if B > 1:
            fit = min(fit, max(1, -(-B // 2)))
        # prefer block_b*L aligned to the MXU row dim when it is not much smaller
        aligned = [c for c in range(1, fit + 1) if (c * L) % 256 == 0]
        block_b = max(aligned) if (aligned and max(aligned) * 2 >= fit) else fit
        block_b = max(block_b, 1)

    num_steps = -(-B // block_b)
    if num_steps > 1 and num_steps % 2:
        num_steps += 1               # even step count across v7x's 2 TCs
    B_pad = num_steps * block_b

    if B_pad != B:
        pad = ((0, B_pad - B), (0, 0), (0, 0))
        enc_bf16 = jnp.pad(enc_bf16, pad)
        maps = jnp.pad(maps, pad)

    # Auto-raise the limit if even the chosen tile exceeds the nominal budget.
    actual = resident + 2 * tile_bytes(block_b) + headroom
    vmem_limit = int(max(vmem_budget, actual))

    cost = pl.CostEstimate(
        flops=2 * B_pad * L * D * n_pad + 4 * B_pad * L * n_pad,
        transcendentals=B_pad * L * n_pad,
        bytes_accessed=(B_pad * L * D * 2 + B_pad * L * 4
                        + D * n_pad * 2 + n_pad * 4
                        + B_pad * L * n_pad * 2),
    )

    out = pl.pallas_call(
        casrel_kernel,
        out_shape=jax.ShapeDtypeStruct((B_pad, L, n_pad), jnp.bfloat16),
        grid=(num_steps,),
        in_specs=[
            pl.BlockSpec((block_b, L, D), lambda b: (b, 0, 0)),      # encoded_text
            pl.BlockSpec((block_b, L, 1), lambda b: (b, 0, 0)),      # summed maps
            pl.BlockSpec((D, n_pad), lambda b: (0, 0)),              # fused weights
            pl.BlockSpec((1, n_pad), lambda b: (0, 0)),              # fused bias
        ],
        out_specs=pl.BlockSpec((block_b, L, n_pad), lambda b: (b, 0, 0)),
        compiler_params=pltpu.CompilerParams(
            dimension_semantics=("parallel",),
            vmem_limit_bytes=vmem_limit),
        cost_estimate=cost,
    )(enc_bf16, maps, packed["w_all"], packed["b_all"])

    # One contiguous slice of the slab, upcast once, then split.
    out = out[:B, :, :n_out].astype(jnp.float32)
    psh = out[:, :, 0:1]
    pst = out[:, :, 1:2]
    poh = out[:, :, 2:2 + R]
    pot = out[:, :, 2 + R:2 + 2 * R]
    return psh, pst, poh, pot


def reference_forward(encoded_text, sub_head, sub_tail, params):
    """Plain-JAX f32 replica of the PyTorch semantics, for a sanity check."""
    psh = jax.nn.sigmoid(encoded_text @ params["w_sh"] + params["b_sh"])
    pst = jax.nn.sigmoid(encoded_text @ params["w_st"] + params["b_st"])
    sh_map = sub_head[:, None, :]
    st_map = sub_tail[:, None, :]
    s_h = jnp.matmul(sh_map, encoded_text)
    s_t = jnp.matmul(st_map, encoded_text)
    enc2 = encoded_text + (s_h + s_t) / 2.0
    poh = jax.nn.sigmoid(enc2 @ params["w_oh"] + params["b_oh"])
    pot = jax.nn.sigmoid(enc2 @ params["w_ot"] + params["b_ot"])
    return psh, pst, poh, pot


if __name__ == "__main__":
    B, L, D, R, VOCAB = 2, 8, 32, 4, 50   # bert_dim=768 in the real model; D=32 here

    key = jax.random.PRNGKey(0)
    k_emb, k_tok, k_sh, k_st, k_wsh, k_wst, k_woh, k_wot = jax.random.split(key, 8)

    # --- deterministic parameter init (shapes from the module __init__) ---
    params = {
        "w_sh": (jax.random.normal(k_wsh, (D, 1), jnp.float32) * 0.05),
        "b_sh": jnp.zeros((1, 1), jnp.float32),
        "w_st": (jax.random.normal(k_wst, (D, 1), jnp.float32) * 0.05),
        "b_st": jnp.full((1, 1), 0.01, jnp.float32),
        "w_oh": (jax.random.normal(k_woh, (D, R), jnp.float32) * 0.05),
        "b_oh": jnp.zeros((1, R), jnp.float32),
        "w_ot": (jax.random.normal(k_wot, (D, R), jnp.float32) * 0.05),
        "b_ot": jnp.full((1, R), 0.01, jnp.float32),
    }
    packed = pack_casrel_params(params)          # packed once, reused per call

    # --- inputs mirroring data['token_ids'] / data['mask'] / sub_head / sub_tail ---
    token_ids = jax.random.randint(k_tok, (B, L), 0, VOCAB)
    mask = jnp.ones((B, L), jnp.float32)
    sub_head = (jax.random.uniform(k_sh, (B, L)) > 0.7).astype(jnp.float32)
    sub_tail = (jax.random.uniform(k_st, (B, L)) > 0.7).astype(jnp.float32)

    # TODO(synk): BertModel.from_pretrained has no Pallas equivalent; the
    # encoder is replaced by a deterministic embedding-lookup stub.
    emb_table = jax.random.normal(k_emb, (VOCAB, D), jnp.float32) * 0.1
    encoded_text = emb_table[token_ids] * mask[:, :, None]   # (B, L, D)

    outs = casrel_forward(encoded_text, sub_head, sub_tail, packed)
    outs = jax.block_until_ready(outs)

    refs = reference_forward(encoded_text, sub_head, sub_tail, params)
    # bf16 matmul operands + bf16 output store => loosened tolerance vs f32 ref.
    for o, r in zip(outs, refs):
        np.testing.assert_allclose(np.asarray(o), np.asarray(r),
                                   rtol=2e-2, atol=5e-3)

    print("KERNEL_OK")
</pallas_src>

<mosaic_0001>
module attributes {stable_mosaic.version = 11 : i64} {
  func.func @casrel_kernel(%arg0: i32, %arg1: memref<1x8x32xbf16, #tpu.memory_space<vmem>>, %arg2: memref<1x8x1xf32, #tpu.memory_space<vmem>>, %arg3: memref<32x128xbf16, #tpu.memory_space<vmem>>, %arg4: memref<1x128xf32, #tpu.memory_space<vmem>>, %arg5: memref<1x8x128xbf16, #tpu.memory_space<vmem>>) attributes {dimension_semantics = [#tpu.dimension_semantics<parallel>], iteration_bounds = array<i64: 2>, scalar_prefetch = 0 : i64, scratch_operands = 0 : i64, tpu.core_type = #tpu.core_type<tc>, window_params = [{transform_indices = @transform_0, window_bounds = array<i64: 1, 8, 32>}, {transform_indices = @transform_1, window_bounds = array<i64: 1, 8, 1>}, {pipeline_mode = #tpu.pipeline_mode<synchronous>, transform_indices = @transform_2, window_bounds = array<i64: 32, 128>}, {pipeline_mode = #tpu.pipeline_mode<synchronous>, transform_indices = @transform_3, window_bounds = array<i64: 1, 128>}, {transform_indices = @transform_4, window_bounds = array<i64: 1, 8, 128>}]} {
    %c0 = arith.constant 0 : index
    %c0_0 = arith.constant 0 : index
    %c0_1 = arith.constant 0 : index
    %0 = vector.load %arg1[%c0, %c0_0, %c0_1] : memref<1x8x32xbf16, #tpu.memory_space<vmem>>, vector<1x8x32xbf16>
    %1 = vector.shape_cast %0 : vector<1x8x32xbf16> to vector<8x32xbf16>
    %c0_2 = arith.constant 0 : index
    %c0_3 = arith.constant 0 : index
    %2 = vector.load %arg3[%c0_2, %c0_3] : memref<32x128xbf16, #tpu.memory_space<vmem>>, vector<32x128xbf16>
    %cst = arith.constant dense<0.000000e+00> : vector<8x128xf32>
    %3 = tpu.matmul %1, %2, %cst {dimension_numbers = #tpu.dot_dimension_numbers<[1], [0], [0], [1], [0, 0, 1, 1], [], []>} : vector<8x32xbf16>, vector<32x128xbf16>, vector<8x128xf32> -> vector<8x128xf32>
    %4 = vector.shape_cast %3 : vector<8x128xf32> to vector<1x8x128xf32>
    %c0_4 = arith.constant 0 : index
    %c0_5 = arith.constant 0 : index
    %c0_6 = arith.constant 0 : index
    %5 = vector.load %arg2[%c0_4, %c0_5, %c0_6] : memref<1x8x1xf32, #tpu.memory_space<vmem>>, vector<1x8x1xf32>
    %6 = vector.broadcast %5 : vector<1x8x1xf32> to vector<1x8x128xf32>
    %7 = arith.mulf %6, %4 : vector<1x8x128xf32>
    %cst_7 = arith.constant dense<0.000000e+00> : vector<1x128xf32>
    %8 = vector.multi_reduction <add>, %7, %cst_7 [1] : vector<1x8x128xf32> to vector<1x128xf32>
    %9 = vector.shape_cast %8 : vector<1x128xf32> to vector<1x1x128xf32>
    %10 = tpu.iota {dimensions = array<i32: 2>} : vector<1x1x128xi32>
    %c2_i32 = arith.constant 2 : i32
    %11 = vector.broadcast %c2_i32 : i32 to vector<1x1x128xi32>
    %12 = arith.cmpi sge, %10, %11 : vector<1x1x128xi32>
    %cst_8 = arith.constant 0.000000e+00 : f32
    %13 = vector.broadcast %cst_8 : f32 to vector<1x1x128xf32>
    %14 = arith.select %12, %9, %13 : vector<1x1x128xi1>, vector<1x1x128xf32>
    %15 = vector.broadcast %14 : vector<1x1x128xf32> to vector<1x8x128xf32>
    %16 = arith.addf %4, %15 : vector<1x8x128xf32>
    %c0_9 = arith.constant 0 : index
    %c0_10 = arith.constant 0 : index
    %17 = vector.load %arg4[%c0_9, %c0_10] : memref<1x128xf32, #tpu.memory_space<vmem>>, vector<1x128xf32>
    %18 = vector.shape_cast %17 : vector<1x128xf32> to vector<1x1x128xf32>
    %19 = vector.broadcast %18 : vector<1x1x128xf32> to vector<1x8x128xf32>
    %20 = arith.addf %16, %19 : vector<1x8x128xf32>
    %21 = arith.negf %20 : vector<1x8x128xf32>
    %22 = math.exp %21 : vector<1x8x128xf32>
    %cst_11 = arith.constant 1.000000e+00 : f32
    %23 = vector.broadcast %cst_11 : f32 to vector<1x8x128xf32>
    %24 = arith.addf %23, %22 : vector<1x8x128xf32>
    %25 = arith.divf %23, %24 : vector<1x8x128xf32>
    %26 = arith.truncf %25 : vector<1x8x128xf32> to vector<1x8x128xbf16>
    %c0_12 = arith.constant 0 : index
    %c0_13 = arith.constant 0 : index
    %c0_14 = arith.constant 0 : index
    %27 = vector.load %arg5[%c0_12, %c0_13, %c0_14] : memref<1x8x128xbf16, #tpu.memory_space<vmem>>, vector<1x8x128xbf16>
    tpu.vector_store %arg5[%c0_12, %c0_13, %c0_14], %26 {strides = array<i32>} : memref<1x8x128xbf16, #tpu.memory_space<vmem>>, vector<1x8x128xbf16>,
    return
  }
  func.func @transform_0(%arg0: i32) -> (i32, i32, i32) {
    %c0_i32 = arith.constant 0 : i32
    %c0_i32_0 = arith.constant 0 : i32
    %c0_i32_1 = arith.constant 0 : i32
    return %arg0, %c0_i32, %c0_i32_0 : i32, i32, i32
  }
  func.func @transform_1(%arg0: i32) -> (i32, i32, i32) {
    %c0_i32 = arith.constant 0 : i32
    %c0_i32_0 = arith.constant 0 : i32
    %c0_i32_1 = arith.constant 0 : i32
    return %arg0, %c0_i32, %c0_i32_0 : i32, i32, i32
  }
  func.func @transform_2(%arg0: i32) -> (i32, i32) {
    %c0_i32 = arith.constant 0 : i32
    %c0_i32_0 = arith.constant 0 : i32
    %c0_i32_1 = arith.constant 0 : i32
    return %c0_i32, %c0_i32_0 : i32, i32
  }
  func.func @transform_3(%arg0: i32) -> (i32, i32) {
    %c0_i32 = arith.constant 0 : i32
    %c0_i32_0 = arith.constant 0 : i32
    %c0_i32_1 = arith.constant 0 : i32
    return %c0_i32, %c0_i32_0 : i32, i32
  }
  func.func @transform_4(%arg0: i32) -> (i32, i32, i32) {
    %c0_i32 = arith.constant 0 : i32
    %c0_i32_0 = arith.constant 0 : i32
    %c0_i32_1 = arith.constant 0 : i32
    return %arg0, %c0_i32, %c0_i32_0 : i32, i32, i32
  }
}

</mosaic_0001>

<llo_original>
// kernel: tpu_custom_call.1
$region0: #{tpu_custom_call.1}
  #allocation0 [shape = 'u32[]', space=smem, size = 0x4, offset = 0x4, fixed_abs, tag = 'smem constant byte address 0x4 - core index']
  #allocation1 [shape = 'u32[144,128]{1,0:T(1,128)}', space=vmem, size = 0x12000, scoped, tag = 'internal scratch']
  %s0 = inlined_call_operand.vmem [shape: bf16[2,8,32], index: 0, kind: input, shape index: {}]
  %s1 = inlined_call_operand.vmem [shape: f32[2,8,1], index: 1, kind: input, shape index: {}]
  %s2 = inlined_call_operand.vmem [shape: bf16[32,128], index: 2, kind: input, shape index: {}]
  %s3 = inlined_call_operand.vmem [shape: f32[1,128], index: 3, kind: input, shape index: {}]
  %s4 = inlined_call_operand.hbm [shape: bf16[2,8,128], index: 4, kind: output, shape index: {}]
  %s5 = sld [smem:[#allocation0]]
  $region49: #{tpu_custom_call.1} parent=0
    _
  %s7 = ssub.s32 1, %s5
  %s8 = scalar_select 0, %s7, %s5
  $region1: #{tpu_custom_call.1} parent=0
    #allocation2 [shape = 'u8[4096]{0}', space=vmem, size = 0x1000, scoped, tag = 'output window, operand 0']
    #allocation3 [shape = 's32[2]{0}', space=sflag, size = 0x8, scoped, tag = 'scoped memory for tpu_custom_call.1']
    %9 = vsyncpa [#allocation3], 0
    %s10 = scalar_lea.sflag [#allocation3], 1
    %11 = vsyncpa %s10, 0
    loop: start=0, step=1, limit=4
    $region2: #{tpu_custom_call.1} parent=1 // loop_pre_header
      _
    $region3: #{tpu_custom_call.1} parent=1 // loop_header
      %s13 = sphi 0, %s17
      %p14 = scmp.ge.s32.totalorder %s13, 4
      %s23 = sphi 0, %s25
      %s26 = sphi 0, %s23
      %s27 = sphi 0, %s26
      %s43 = sphi 0, %s27
      %s49 = sphi 0, %s51
      %s52 = sphi 0, %s49
      %s53 = sphi 0, %s52
      %s69 = sphi 0, %s53
      %s73 = sphi 0, %s73
      %s75 = sphi 0, %s73
      %s76 = sphi 0, %s75
      %s90 = sphi 0, %s76
      %s94 = sphi 0, %s94
      %s96 = sphi 0, %s94
      %s97 = sphi 0, %s96
      %s111 = sphi 0, %s97
      %s117 = sphi 0, %s119
      %s120 = sphi 0, %s117
      %s121 = sphi 0, %s120
      %s137 = sphi 0, %s121
    $region4: #{tpu_custom_call.1} parent=1 // loop_header_branch
      %16 = sbr.rel (%p14) target = $region8
    $region5: #{tpu_custom_call.1} parent=1 // loop_body
      %s18 = ssub.s32 %s13, 1
      %s19 = ssub.s32 %s13, 2
      %s20 = sadd.s32 %s13, 1
      %s21 = ssub.s32 %s13, %s20
      %p22 = scmp.eq.s32.totalorder %s21, 0
      %s24 = sadd.s32 %s23, 1
      %s25 = scalar_select %p22, %s23, %s24
      %p28 = pneg %p22
      %p29 = scmp.eq.s32.totalorder %s13, 1
      %p30 = por %p28, %p29
      %p31 = scmp.ne.s32.totalorder %s23, %s26
      %p32 = scmp.eq.s32.totalorder %s13, 0
      %p33 = por %p31, %p32
      %p34 = scmp.ne.s32.totalorder %s23, %s26
      %p35 = scmp.eq.s32.totalorder %s18, 1
      %p36 = por %p34, %p35
      %p37 = scmp.ne.s32.totalorder %s26, %s27
      %p38 = scmp.eq.s32.totalorder %s18, 0
      %p39 = por %p37, %p38
      %p40 = scmp.ne.s32.totalorder %s26, %s27
      %p41 = scmp.eq.s32.totalorder %s19, 1
      %p42 = por %p40, %p41
      %p44 = scmp.ne.s32.totalorder %s27, %s43
      %p45 = scmp.eq.s32.totalorder %s19, 0
      %p46 = por %p44, %p45
      %s47 = ssub.s32 %s13, %s20
      %p48 = scmp.eq.s32.totalorder %s47, 0
      %s50 = sadd.s32 %s49, 1
      %s51 = scalar_select %p48, %s49, %s50
      %p54 = pneg %p48
      %p55 = scmp.eq.s32.totalorder %s13, 1
      %p56 = por %p54, %p55
      %p57 = scmp.ne.s32.totalorder %s49, %s52
      %p58 = scmp.eq.s32.totalorder %s13, 0
      %p59 = por %p57, %p58
      %p60 = scmp.ne.s32.totalorder %s49, %s52
      %p61 = scmp.eq.s32.totalorder %s18, 1
      %p62 = por %p60, %p61
      %p63 = scmp.ne.s32.totalorder %s52, %s53
      %p64 = scmp.eq.s32.totalorder %s18, 0
      %p65 = por %p63, %p64
      %p66 = scmp.ne.s32.totalorder %s52, %s53
      %p67 = scmp.eq.s32.totalorder %s19, 1
      %p68 = por %p66, %p67
      %p70 = scmp.ne.s32.totalorder %s53, %s69
      %p71 = scmp.eq.s32.totalorder %s19, 0
      %p72 = por %p70, %p71
      %s74 = sadd.s32 %s73, 1
      %p77 = scmp.eq.s32.totalorder %s13, 1
      %p78 = scmp.ne.s32.totalorder %s73, %s75
      %p79 = scmp.eq.s32.totalorder %s13, 0
      %p80 = por %p78, %p79
      %p81 = scmp.ne.s32.totalorder %s73, %s75
      %p82 = scmp.eq.s32.totalorder %s18, 1
      %p83 = por %p81, %p82
      %p84 = scmp.ne.s32.totalorder %s75, %s76
      %p85 = scmp.eq.s32.totalorder %s18, 0
      %p86 = por %p84, %p85
      %p87 = scmp.ne.s32.totalorder %s75, %s76
      %p88 = scmp.eq.s32.totalorder %s19, 1
      %p89 = por %p87, %p88
      %p91 = scmp.ne.s32.totalorder %s76, %s90
      %p92 = scmp.eq.s32.totalorder %s19, 0
      %p93 = por %p91, %p92
      %s95 = sadd.s32 %s94, 1
      %p98 = scmp.eq.s32.totalorder %s13, 1
      %p99 = scmp.ne.s32.totalorder %s94, %s96
      %p100 = scmp.eq.s32.totalorder %s13, 0
      %p101 = por %p99, %p100
      %p102 = scmp.ne.s32.totalorder %s94, %s96
      %p103 = scmp.eq.s32.totalorder %s18, 1
      %p104 = por %p102, %p103
      %p105 = scmp.ne.s32.totalorder %s96, %s97
      %p106 = scmp.eq.s32.totalorder %s18, 0
      %p107 = por %p105, %p106
      %p108 = scmp.ne.s32.totalorder %s96, %s97
      %p109 = scmp.eq.s32.totalorder %s19, 1
      %p110 = por %p108, %p109
      %p112 = scmp.ne.s32.totalorder %s97, %s111
      %p113 = scmp.eq.s32.totalorder %s19, 0
      %p114 = por %p112, %p113
      %s115 = ssub.s32 %s13, %s20
      %p116 = scmp.eq.s32.totalorder %s115, 0
      %s118 = sadd.s32 %s117, 1
      %s119 = scalar_select %p116, %s117, %s118
      %p122 = pneg %p116
      %p123 = scmp.eq.s32.totalorder %s13, 1
      %p124 = por %p122, %p123
      %p125 = scmp.ne.s32.totalorder %s117, %s120
      %p126 = scmp.eq.s32.totalorder %s13, 0
      %p127 = por %p125, %p126
      %p128 = scmp.ne.s32.totalorder %s117, %s120
      %p129 = scmp.eq.s32.totalorder %s18, 1
      %p130 = por %p128, %p129
      %p131 = scmp.ne.s32.totalorder %s120, %s121
      %p132 = scmp.eq.s32.totalorder %s18, 0
      %p133 = por %p131, %p132
      %p134 = scmp.ne.s32.totalorder %s120, %s121
      %p135 = scmp.eq.s32.totalorder %s19, 1
      %p136 = por %p134, %p135
      %p138 = scmp.ne.s32.totalorder %s121, %s137
      %p139 = scmp.eq.s32.totalorder %s19, 0
      %p140 = por %p138, %p139
      %p141 = scmp.le.s32.totalorder 1, %s13
      %p142 = scmp.lt.s32.totalorder %s13, 3
      %p143 = pnand %p141, %p142
      %p144 = pneg %p143
      // Predicated region
      $region9: #{tpu_custom_call.1} parent=5 // pred_check
        _
      $region10: #{tpu_custom_call.1} parent=5 // pred_check_branch
        %146 = sbr.rel (%p143) target = $region12
      $region11: #{tpu_custom_call.1} parent=5 // pred_region
        %s147 = ssub.s32 %s13, 1
        // Predicated region
        $region13: #{tpu_custom_call.1} parent=11 // pred_check
          %p148 = pneg %p86
        $region14: #{tpu_custom_call.1} parent=11 // pred_check_branch
          %150 = sbr.rel (%p148) target = $region16
        $region15: #{tpu_custom_call.1} parent=11 // pred_region
          _
        $region16: #{tpu_custom_call.1} parent=11 // pred_fallthru
          _
        // Predicated region
        $region17: #{tpu_custom_call.1} parent=11 // pred_check
          %p151 = pneg %p107
        $region18: #{tpu_custom_call.1} parent=11 // pred_check_branch
          %153 = sbr.rel (%p151) target = $region20
        $region19: #{tpu_custom_call.1} parent=11 // pred_region
          _
        $region20: #{tpu_custom_call.1} parent=11 // pred_fallthru
          _
      $region12: #{tpu_custom_call.1} parent=5 // pred_fallthru
        _
      %p154 = scmp.lt.s32.totalorder %s13, 2
      // Predicated region
      $region21: #{tpu_custom_call.1} parent=5 // pred_check
        %p155 = pneg %p154
      $region22: #{tpu_custom_call.1} parent=5 // pred_check_branch
        %157 = sbr.rel (%p155) target = $region24
      $region23: #{tpu_custom_call.1} parent=5 // pred_region
        // Predicated region
        $region25: #{tpu_custom_call.1} parent=23 // pred_check
          %p158 = pneg %p33
        $region26: #{tpu_custom_call.1} parent=23 // pred_check_branch
          %160 = sbr.rel (%p158) target = $region28
        $region27: #{tpu_custom_call.1} parent=23 // pred_region
          %p161 = scmp.lt.s32.totalorder %s13, 1
          %s162 = scalar_select %p161, %s13, 1
          %s163 = smul.addr %s162, 4
          %s164 = scalar_lea.vmem %s0, %s163
        $region28: #{tpu_custom_call.1} parent=23 // pred_fallthru
          _
        // Predicated region
        $region29: #{tpu_custom_call.1} parent=23 // pred_check
          %p165 = pneg %p59
        $region30: #{tpu_custom_call.1} parent=23 // pred_check_branch
          %167 = sbr.rel (%p165) target = $region32
        $region31: #{tpu_custom_call.1} parent=23 // pred_region
          %p168 = scmp.lt.s32.totalorder %s13, 1
          %s169 = scalar_select %p168, %s13, 1
          %s170 = smul.addr %s169, 8
          %s171 = scalar_lea.vmem %s1, %s170
        $region32: #{tpu_custom_call.1} parent=23 // pred_fallthru
          _
      $region24: #{tpu_custom_call.1} parent=5 // pred_fallthru
        _
      %p172 = scmp.le.s32.totalorder 1, %s13
      %p173 = scmp.lt.s32.totalorder %s13, 3
      %p174 = pnand %p172, %p173
      %p175 = pneg %p174
      // Predicated region
      $region33: #{tpu_custom_call.1} parent=5 // pred_check
        _
      $region34: #{tpu_custom_call.1} parent=5 // pred_check_branch
        %177 = sbr.rel (%p174) target = $region36
      $region35: #{tpu_custom_call.1} parent=5 // pred_region
        %s178 = ssub.s32 %s13, 1
        %p179 = scmp.lt.s32.totalorder %s18, 1
        %s180 = scalar_select %p179, %s18, 1
        %s181 = smul.addr %s180, 4
        %s182 = scalar_lea.vmem %s0, %s181
        %p183 = pneg %p39
        %p184 = pneg %p36
        %p185 = scmp.lt.s32.totalorder %s18, 1
        %s186 = scalar_select %p185, %s18, 1
        %s187 = smul.addr %s186, 8
        %s188 = scalar_lea.vmem %s1, %s187
        %p189 = pneg %p65
        %p190 = pneg %p62
        %p191 = pneg %p86
        %p192 = pneg %p83
        %p193 = pneg %p107
        %p194 = pneg %p104
        %p195 = pneg %p133
        %p196 = pneg %p130
        %s197 = sand.u32 %s120, 1
        %s198 = scalar_lea.sflag [#allocation3], %s197
        %s199 = sand.u32 %s120, 1
        %s200 = smul.addr %s199, 4
        %s201 = scalar_lea.vmem [#allocation2], %s200
        %p202 = scmp.lt.s32.totalorder %s18, 1
        %s203 = scalar_select %p202, %s18, 1
        %s204 = smul.addr %s203, 4
        %s205 = scalar_lea.vmem %s0, %s204
        %p206 = scmp.lt.s32.totalorder %s18, 1
        %s207 = scalar_select %p206, %s18, 1
        %s208 = smul.addr %s207, 8
        %s209 = scalar_lea.vmem %s1, %s208
        %v211 = vld [vmem:[%s205] sm:$0xf]
        %v212 = vld [vmem:[%s2] sm:$0xf]
        %v213 = vld [vmem:[%s2 + $0x4] sm:$0xf]
        %v214 = vld [vmem:[%s2 + $0x8] sm:$0xf]
        %v215 = vld [vmem:[%s2 + $0xc] sm:$0xf]
        %v220 = vunpack.c.l.b16 %v212
        %v221 = vunpack.c.l.b16 %v213
        %v222 = vunpack.c.l.b16 %v214
        %v223 = vunpack.c.l.b16 %v215
        %v224 = vpack.c.b16 %v221, %v220
        %v225 = vpack.c.b16 %v223, %v222
        %vm228 = vcmask 261120
        %v230 = vsel %vm228, %v211, 0
        %232 = vmatprep.subr.bf16.mxu0 0
        %233 = vmatpush1.bf16.msra.mxu0 %v224
        %234 = vmatprep.subr.bf16.mxu0 0
        %235 = vmatpush1.bf16.msra.mxu0 %v225
        %236 = vmatprep.subr.bf16.mxu0 0
        %237 = vmatpush1.bf16.msra.mxu0 0
        %238 = vmatprep.subr.bf16.mxu0 0
        %239 = vmatpush1.bf16.msra.mxu0 0
        %240 = vmatprep.subr.bf16.mxu0 0
        %241 = vmatpush1.bf16.msra.mxu0 0
        %242 = vmatprep.subr.bf16.mxu0 0
        %243 = vmatpush1.bf16.msra.mxu0 0
        %244 = vmatprep.subr.bf16.mxu0 0
        %245 = vmatpush1.bf16.msra.mxu0 0
        %246 = vmatprep.subr.bf16.mxu0 0
        %247 = vmatpush1.bf16.msra.mxu0 0
        %248 = vmatprep.subr.bf16.mxu0 0
        %249 = vmatpush1.bf16.msra.mxu0 0
        %250 = vmatprep.subr.bf16.mxu0 0
        %251 = vmatpush1.bf16.msra.mxu0 0
        %252 = vmatprep.subr.bf16.mxu0 0
        %253 = vmatpush1.bf16.msra.mxu0 0
        %254 = vmatprep.subr.bf16.mxu0 0
        %255 = vmatpush1.bf16.msra.mxu0 0
        %256 = vmatprep.subr.bf16.mxu0 0
        %257 = vmatpush1.bf16.msra.mxu0 0
        %258 = vmatprep.subr.bf16.mxu0 0
        %259 = vmatpush1.bf16.msra.mxu0 0
        %260 = vmatprep.subr.bf16.mxu0 0
        %261 = vmatpush1.bf16.msra.mxu0 0
        %262 = vmatprep.subr.bf16.mxu0 0
        %263 = vmatpush1.bf16.msra.mxu0 0
        %264 = vmatprep.mubr.bf16.mxu0 0
        %265 = vmatmul.mubr.bf16.gmra.mrb[0].mxu0 %v230
        %v266 = vpop.f32.mrb[0].mxu0
        %v267 = vadd.f32 0.0, %v266
        %v268 = vpop.f32.mrb[0].mxu0
        %v269 = vpop.f32.mrb[0].mxu0
        %v270 = vpop.f32.mrb[0].mxu0
        %271 = vdwg.mxu0
        %v272 = vld [vmem:[%s209] sm:$0xff]
        %274 = vset.pattern.permute.xlu0 0
        %275 = vperm.xlu0 %274, %v272
        %v276 = vpop.permute.xlu0 %275
        %v278 = vmul.f32 %v276, %v267
        %v279 = vrot.slane %v278, 4
        %v280 = vadd.f32 %v278, %v279
        %v281 = vrot.slane %v280, 2
        %v282 = vadd.f32 %v280, %v281
        %v283 = vrot.slane %v282, 1
        %v284 = vadd.f32 %v282, %v283
        %v285 = vlaneseq
        %v286 = vand.u32 %v285, 127
        %vm287 = vcmp.ge.s32.totalorder %v286, 2
        %v288 = vsel %vm287, %v284, 0.0
        %v289 = vadd.f32 %v267, %v288
        %v290 = vld [vmem:[%s3] sm:$0x1]
        %v292 = vlaneseq
        %v293 = vshrl.u32 %v292, 7
        %v294 = vsub.s32 0, %v293
        %v295 = vrot.slane %v290, %v294
        %v297 = vadd.f32 %v289, %v295
        %v298 = vxor.u32 %v297, 2147483648
        %v299 = vmul.f32 %v298, 1.442695
        %v300 = vpow.pop %v299
        %v301 = vadd.f32 %v300, 1.0
        %v302 = vrcp.pop %v301
        %v303 = vmul.f32 1.0, %v302
        %v304 = vpack.c.bf16 %v303, %v303
        %305 = vst [vmem:[%s201] sm:$0xf] %v304
        %s306 = sand.u32 %s120, 1
        %s307 = scalar_lea.sflag [#allocation3], %s306
        %s308 = sand.u32 %s120, 1
        %s309 = smul.addr %s308, 4
        %s310 = scalar_lea.vmem [#allocation2], %s309
        // Predicated region
        $region37: #{tpu_custom_call.1} parent=35 // pred_check
          %p311 = pneg %p130
        $region38: #{tpu_custom_call.1} parent=35 // pred_check_branch
          %313 = sbr.rel (%p311) target = $region40
        $region39: #{tpu_custom_call.1} parent=35 // pred_region
          %s315 = ssub.s32 64, 64
          %316 = vsyncadd %s307, %s315
          %s317 = smul.addr %s18, 64
          %s318 = scalar_lea.hbm %s4, %s317
          %s320 = sshll.u32 %s310, 4
          %s321 = int_to_ptr.vmem [resolvable:$true] %s320
          %323 = dma.vmem_to_hbm [thread:$0]  %s321, 64, %s318, %s307
        $region40: #{tpu_custom_call.1} parent=35 // pred_fallthru
          _
      $region36: #{tpu_custom_call.1} parent=5 // pred_fallthru
        _
      %p324 = scmp.le.s32.totalorder 2, %s13
      // Predicated region
      $region41: #{tpu_custom_call.1} parent=5 // pred_check
        %p325 = pneg %p324
      $region42: #{tpu_custom_call.1} parent=5 // pred_check_branch
        %327 = sbr.rel (%p325) target = $region44
      $region43: #{tpu_custom_call.1} parent=5 // pred_region
        %s328 = ssub.s32 %s13, 2
        // Predicated region
        $region45: #{tpu_custom_call.1} parent=43 // pred_check
          %p329 = pneg %p136
        $region46: #{tpu_custom_call.1} parent=43 // pred_check_branch
          %331 = sbr.rel (%p329) target = $region48
        $region47: #{tpu_custom_call.1} parent=43 // pred_region
          %s332 = sand.u32 %s121, 1
          %s333 = scalar_lea.sflag [#allocation3], %s332
          %s334 = sand.u32 %s121, 1
          %s335 = smul.addr %s334, 4
          %s336 = scalar_lea.vmem [#allocation2], %s335
          %337 = dma.done %s333, 64
        $region48: #{tpu_custom_call.1} parent=43 // pred_fallthru
          _
      $region44: #{tpu_custom_call.1} parent=5 // pred_fallthru
        _
    $region6: #{tpu_custom_call.1} parent=1 // loop_footer
      %s17 = sadd.s32 1, %s13
    $region7: #{tpu_custom_call.1} parent=1 // loop_footer_branch
      %12 = sbr.rel target = $region3
    $region8: #{tpu_custom_call.1} parent=1 // loop_exit
      _
    %338 = vsyncpa [#allocation3], 1
    %s339 = scalar_lea.sflag [#allocation3], 1
    %340 = vsyncpa %s339, 1

</llo_original>
